<compile_context>
chip_gen: v5e
topology: v5e:2x2
jax: 0.10.0
libtpu: 0.0.40
codegen_flags: <defaults>
</compile_context>

<pallas_src>
import jax
import jax.numpy as jnp
from jax.experimental import pallas as pl
from jax.experimental.pallas import tpu as pltpu


def _identity_copy_kernel(x_ref, h_ref, sem):
    # main / D / Q are empty Sequentials => identity.  Materialize h with a
    # single HBM->HBM DMA (no VMEM round trip, no tiling, no padding).
    cp = pltpu.make_async_copy(x_ref, h_ref, sem)
    cp.start()
    cp.wait()


def _identity_copy(x):
    """Materialize a copy of x via one HBM->HBM DMA inside a Pallas kernel."""
    return pl.pallas_call(
        _identity_copy_kernel,
        out_shape=jax.ShapeDtypeStruct(x.shape, x.dtype),
        in_specs=[pl.BlockSpec(memory_space=pl.ANY)],
        out_specs=pl.BlockSpec(memory_space=pl.ANY),
        scratch_shapes=[pltpu.SemaphoreType.DMA(())],
        cost_estimate=pl.CostEstimate(
            flops=0,
            transcendentals=0,
            bytes_accessed=2 * x.size * x.dtype.itemsize,
        ),
    )(x)


def discriminator_forward(x, *, materialize=False):
    """Pallas implementation of Discriminator.forward.

    Args:
      x: float array of shape [N, C, H, W] (NCHW, like PyTorch).
      materialize: if True, produce the hidden state h in a fresh HBM buffer
        via a Pallas HBM->HBM DMA kernel.  If False (default), the identity
        module is elided and both outputs are metadata-only reshapes of x.

    Returns:
      (real_or_fake, info):
        real_or_fake: [N*C*H*W, 1]   (== x.view(-1, 1))
        info:         x.squeeze()    (size-1 dims removed)
    """
    if materialize:
        h = _identity_copy(x)
    else:
        # Identity module: no kernel needed at all (biggest win on every gen).
        h = x

    real_or_fake = h.reshape(-1, 1)   # D(h).view(-1, 1)
    info = jnp.squeeze(h)             # Q(h).squeeze()
    return real_or_fake, info


if __name__ == "__main__":
    key = jax.random.PRNGKey(0)
    # Small NCHW input consistent with a conv-style discriminator.
    x = jax.random.normal(key, (2, 4, 16, 16), dtype=jnp.float32)

    # Materialized (Pallas DMA kernel) path.
    fwd_kernel = jax.jit(lambda v: discriminator_forward(v, materialize=True))
    real_or_fake, info = fwd_kernel(x)
    jax.block_until_ready((real_or_fake, info))

    # Elided (metadata-only) fast path.
    fwd_fast = jax.jit(discriminator_forward)
    rf_fast, info_fast = fwd_fast(x)
    jax.block_until_ready((rf_fast, info_fast))

    # Sanity checks against the reference semantics (identity branches).
    assert real_or_fake.shape == (2 * 4 * 16 * 16, 1)
    assert info.shape == (2, 4, 16, 16)  # no size-1 dims to squeeze
    assert jnp.allclose(real_or_fake.reshape(x.shape), x)
    assert jnp.allclose(info, x)
    assert jnp.allclose(rf_fast, real_or_fake)
    assert jnp.allclose(info_fast, info)

    print("KERNEL_OK")
</pallas_src>

<mosaic_0001>
module attributes {stable_mosaic.version = 11 : i64} {
  func.func @_identity_copy_kernel(%arg0: memref<2x4x16x16xf32, #tpu.memory_space<any>>, %arg1: memref<2x4x16x16xf32, #tpu.memory_space<any>>, %arg2: memref<!tpu.dma_semaphore, #tpu.memory_space<semaphore_mem>>) attributes {dimension_semantics = [], scalar_prefetch = 0 : i64, scratch_operands = 1 : i64, tpu.core_type = #tpu.core_type<tc>} {
    tpu.enqueue_dma source(%arg0 : memref<2x4x16x16xf32, #tpu.memory_space<any>>) target(%arg1 : memref<2x4x16x16xf32, #tpu.memory_space<any>>) target_semaphore(%arg2 : memref<!tpu.dma_semaphore, #tpu.memory_space<semaphore_mem>>)
    tpu.wait_dma2 semaphore(%arg2 : memref<!tpu.dma_semaphore, #tpu.memory_space<semaphore_mem>>) src(%arg0 : memref<2x4x16x16xf32, #tpu.memory_space<any>>) dst(%arg1 : memref<2x4x16x16xf32, #tpu.memory_space<any>>)
    return
  }
}

</mosaic_0001>

<llo_original>
// kernel: _lambda_.1
$region0: #{_lambda_.1}
  #allocation0 [shape = 'u32[]', space=smem, size = 0x4, offset = 0x4, fixed_abs, tag = 'smem constant byte address 0x4 - core index']
  #allocation1 [shape = 'u32[72,128]{1,0:T(1,128)}', space=vmem, size = 0x9000, scoped, tag = 'internal scratch']
  #allocation2 [shape = 's32[1]{0}', space=sflag, size = 0x4, scoped, tag = 'scratch operand']
  #allocation3 [shape = 's32[]', space=sflag, size = 0x4, offset = 0, fixed_abs, tag = 'sflag constant byte address 0x0 - dummy sync flag']
  #allocation4 [shape = 's32[]', space=sflag, size = 0x4, offset = 0, fixed_abs, tag = 'sflag constant byte address 0x0 - dummy sync flag']
  #allocation5 [shape = 'u32[]', space=smem, size = 0x4, offset = 0x44, fixed_abs, tag = 'smem constant byte address 0x44 - assertion arg 0']
  #allocation6 [shape = 'u32[]', space=smem, size = 0x4, offset = 0x48, fixed_abs, tag = 'smem constant byte address 0x48 - assertion arg 1']
  %s0 = inlined_call_operand.hbm [shape: f32[2,4,16,16], index: 0, kind: input, shape index: {}]
  %s1 = inlined_call_operand.vmem [shape: f32[2,4,16,16], index: 1, kind: output, shape index: {}]
  %s2 = sld [smem:[#allocation0]]
  $region6: #{_lambda_.1} parent=0
    _
  %s4 = ssub.s32 1, %s2
  %s5 = scalar_select 0, %s4, %s2
  // Predicated region
  $region2: #{_lambda_.1} parent=0 // pred_check
    _
  $region3: #{_lambda_.1} parent=0 // pred_check_branch
    %7 = sbr.rel target = $region5
  $region4: #{_lambda_.1} parent=0 // pred_region
    %8 = sst [smem:[#allocation5]] [#allocation4]
    %9 = sst [smem:[#allocation6]] [#allocation3]
  $region5: #{_lambda_.1} parent=0 // pred_fallthru
    _
  %11 = shalt.err (0)
  %s13 = sshll.u32 %s0, 4
  %s14 = int_to_ptr.hbm [resolvable:$true] %s13
  %s15 = sshll.u32 %s1, 4
  %s16 = int_to_ptr.vmem [resolvable:$true] %s15
  %18 = dma.hbm_to_vmem [thread:$0]  %s14, 2048, %s16, [#allocation2]
  %s19 = smul.u32 2, 4
  %s20 = smul.u32 %s19, 16
  %s21 = smul.u32 %s20, 1
  %s22 = sshll.u32 %s21, 4
  %23 = dma.done [#allocation2], %s22
  %24 = vsyncmov [#allocation2]
  %s25 = vpop.sfrf %24
  %p26 = scmp.eq.s32.totalorder %s25, 0
  %p27 = pneg %p26
  %29 = shalt.err (%p27)

</llo_original>
